<compile_context>
chip_gen: v5e
topology: v5e:2x2
jax: 0.10.0
libtpu: 0.0.40
codegen_flags: <defaults>
</compile_context>

<pallas_src>
import functools

import jax
import jax.numpy as jnp
from jax.experimental import pallas as pl
from jax.experimental.pallas import tpu as pltpu


def _select_matmul_kernel(sel_ref, x_ref, y_ref, *, nb):
    """One grid step: Y[b] = sel @ X[b] for the `nb` fused batch elements.

    sel_ref : VMEM (O, C)          -- selection matrix (resident; index map is constant)
    x_ref   : VMEM (nb, C, t_hw)   -- fused batch block, channels-first
    y_ref   : VMEM (nb, O, t_hw)   -- output block (lane dim = spatial, kept dense)
    """
    sel = sel_ref[...].astype(jnp.float32)
    for b in range(nb):  # static unroll; nb is capped small by the wrapper
        x = x_ref[b].astype(jnp.float32)
        # Keep sel as LHS so the output lane dim stays spatial (no relayout needed).
        y_ref[b] = jnp.dot(sel, x, preferred_element_type=jnp.float32)


def _largest_divisor_leq(n, cap):
    cap = max(1, min(n, cap))
    for d in range(cap, 0, -1):
        if n % d == 0:
            return d
    return 1


def concrete_select(X, sel, *, target_block_bytes=2 * 1024 * 1024, max_batch_fuse=32):
    """Y[n] = sel @ X[n].reshape(C, H*W), returned as (N, O, H, W) float32."""
    N, C, H, W = X.shape
    O = sel.shape[0]
    HW = H * W
    x_flat = X.reshape(N, C, HW)  # metadata-only reshape, no HBM pass

    bytes_per_col = (C + O) * 4              # in + out bytes per lane column (f32)
    hw_r = pl.cdiv(HW, 128) * 128            # lane-rounded width (budgeting only)

    if bytes_per_col * hw_r <= target_block_bytes:
        # One grid step covers the full spatial extent; fuse batch elements so each
        # DMA block approaches the target size.
        t_hw, hw_steps = HW, 1
        nb_cap = int(min(max_batch_fuse,
                         max(1, target_block_bytes // max(1, bytes_per_col * hw_r))))
        nb = _largest_divisor_leq(N, nb_cap)
        if N >= 2 and (N // nb) * hw_steps < 2:
            # keep >= 2 grid steps so v7x megacore can split the parallel axes
            nb = _largest_divisor_leq(N, max(1, N // 2))
    else:
        # Tile the spatial (lane) axis in 128-aligned chunks; one batch elem per step.
        nb = 1
        t_hw = max(128, (target_block_bytes // bytes_per_col) // 128 * 128)
        t_hw = min(t_hw, hw_r)
        if t_hw >= HW:
            t_hw, hw_steps = HW, 1
        else:
            hw_steps = pl.cdiv(HW, t_hw)     # final block may be partial (masked)

    grid = (N // nb, hw_steps)
    y = pl.pallas_call(
        functools.partial(_select_matmul_kernel, nb=nb),
        out_shape=jax.ShapeDtypeStruct((N, O, HW), jnp.float32),
        grid=grid,
        in_specs=[
            pl.BlockSpec((O, C), lambda i, j: (0, 0)),            # selection (resident)
            pl.BlockSpec((nb, C, t_hw), lambda i, j: (i, 0, j)),  # fused X block
        ],
        out_specs=pl.BlockSpec((nb, O, t_hw), lambda i, j: (i, 0, j)),
        compiler_params=pltpu.CompilerParams(
            dimension_semantics=("parallel", "parallel")),
    )(sel, x_flat)

    return y.reshape(N, O, H, W)  # metadata-only reshape


class ConcreteEncoder:
    """JAX/Pallas re-implementation of the PyTorch ConcreteEncoder forward pass."""

    def __init__(self, input_dim, output_dim, key,
                 start_temp=10.0, min_temp=0.01, alpha=0.99999):
        self.input_dim = input_dim
        self.output_dim = output_dim
        self.start_temp = start_temp
        self.min_temp = min_temp
        self.alpha = alpha
        self.temp = start_temp
        self.regularizer = lambda: 0
        # xavier_normal_: std = sqrt(2 / (fan_in + fan_out))
        std = (2.0 / (input_dim + output_dim)) ** 0.5
        self.logits = std * jax.random.normal(key, (output_dim, input_dim), jnp.float32)

    def get_gates(self, mode=None):
        return jax.device_get(self.logits)

    def __call__(self, X, noise_key, train=True, X_mask=None, debug=False):
        # TODO(synk): X_mask branch (elementwise X mask + additive -1e7 logits mask)
        # has ambiguous shapes in the original module and is not implemented here.
        assert X_mask is None
        N, C, H, W = X.shape
        assert C == self.input_dim
        O = self.output_dim

        # --- gumbel noise (glue; torch uses torch.rand + clamp(min=1e-7)) ---
        uniform = jnp.maximum(
            jax.random.uniform(noise_key, (O, C), dtype=jnp.float32), 1e-7)
        gumbel = -jnp.log(-jnp.log(uniform))

        # --- stateful temperature anneal (Python-side, like the nn.Module attribute) ---
        self.temp = max(self.temp * self.alpha, self.min_temp)
        inv_temp = 1.0 / self.temp  # multiply instead of divide

        # --- selection matrix, computed ONCE per call (hoisted out of the grid loop) ---
        if train:
            sel = jax.nn.softmax((self.logits + gumbel) * inv_temp, axis=-1)
        else:
            sel = jax.nn.one_hot(jnp.argmax(self.logits, axis=-1), C,
                                 dtype=jnp.float32)

        Y = concrete_select(X, sel)

        if debug:
            # matches the PyTorch module: returns (X, selection)
            return X, sel
        return Y


def _reference(X, logits, gumbel, temp, train):
    if train:
        sel = jax.nn.softmax((logits + gumbel) / temp, axis=-1)
    else:
        sel = jax.nn.one_hot(jnp.argmax(logits, axis=-1), logits.shape[1],
                             dtype=jnp.float32)
    return jnp.einsum("oc,nchw->nohw", sel, X.astype(jnp.float32))


if __name__ == "__main__":
    input_dim = 16    # channel dim C of X
    output_dim = 8    # number of selected features

    root = jax.random.PRNGKey(0)
    k_param, k_x1, k_x2, k_x3, k_n1, k_n2, k_n3, k_sel = jax.random.split(root, 8)

    enc = ConcreteEncoder(input_dim, output_dim, k_param)

    # --- test 1: train=True, N=3, HW multiple of 128 (single-slab path) ---
    N, H, W = 3, 16, 16
    X = jax.random.normal(k_x1, (N, input_dim, H, W), dtype=jnp.float32)
    Y = enc(X, k_n1, train=True)
    jax.block_until_ready(Y)
    assert Y.shape == (N, output_dim, H, W)

    uniform = jnp.maximum(jax.random.uniform(k_n1, (output_dim, input_dim),
                                             dtype=jnp.float32), 1e-7)
    gumbel = -jnp.log(-jnp.log(uniform))
    Y_ref = _reference(X, enc.logits, gumbel, enc.temp, train=True)
    assert jnp.allclose(Y, Y_ref, atol=1e-4, rtol=1e-4)

    # --- test 2: train=False (hard one-hot selection) ---
    Y_eval = enc(X, k_n2, train=False)
    jax.block_until_ready(Y_eval)
    Y_eval_ref = _reference(X, enc.logits, gumbel, enc.temp, train=False)
    assert jnp.allclose(Y_eval, Y_eval_ref, atol=1e-4, rtol=1e-4)

    # --- test 3: non-multiple-of-128 spatial (full-extent lane block, no padding) ---
    N2, H2, W2 = 2, 12, 12
    X2 = jax.random.normal(k_x2, (N2, input_dim, H2, W2), dtype=jnp.float32)
    Y2 = enc(X2, k_n3, train=True)
    jax.block_until_ready(Y2)
    uniform2 = jnp.maximum(jax.random.uniform(k_n3, (output_dim, input_dim),
                                              dtype=jnp.float32), 1e-7)
    gumbel2 = -jnp.log(-jnp.log(uniform2))
    Y2_ref = _reference(X2, enc.logits, gumbel2, enc.temp, train=True)
    assert Y2.shape == (N2, output_dim, H2, W2)
    assert jnp.allclose(Y2, Y2_ref, atol=1e-4, rtol=1e-4)

    # --- test 4: force the HW-tiled path (128-lane tiles + partial final block) ---
    sel_t = jax.nn.softmax(
        jax.random.normal(k_sel, (output_dim, input_dim), dtype=jnp.float32), axis=-1)
    Y4 = concrete_select(X2, sel_t, target_block_bytes=4096)
    jax.block_until_ready(Y4)
    Y4_ref = jnp.einsum("oc,nchw->nohw", sel_t, X2)
    assert jnp.allclose(Y4, Y4_ref, atol=1e-4, rtol=1e-4)

    # --- test 5: batch fusion nb > 1 (small spatial, N=4) ---
    N3, H3, W3 = 4, 8, 8
    X3 = jax.random.normal(k_x3, (N3, input_dim, H3, W3), dtype=jnp.float32)
    Y5 = concrete_select(X3, sel_t)
    jax.block_until_ready(Y5)
    Y5_ref = jnp.einsum("oc,nchw->nohw", sel_t, X3)
    assert jnp.allclose(Y5, Y5_ref, atol=1e-4, rtol=1e-4)

    # --- debug path returns (X, selection) like the PyTorch module ---
    Xd, sel_d = enc(X, k_n1, train=True, debug=True)
    jax.block_until_ready(sel_d)
    assert sel_d.shape == (output_dim, input_dim)

    print("KERNEL_OK")
</pallas_src>

<mosaic_0001>
module attributes {stable_mosaic.version = 11 : i64} {
  func.func @_select_matmul_kernel(%arg0: i32, %arg1: i32, %arg2: memref<8x16xf32, #tpu.memory_space<vmem>>, %arg3: memref<1x16x256xf32, #tpu.memory_space<vmem>>, %arg4: memref<1x8x256xf32, #tpu.memory_space<vmem>>) attributes {dimension_semantics = [#tpu.dimension_semantics<parallel>, #tpu.dimension_semantics<parallel>], iteration_bounds = array<i64: 3, 1>, scalar_prefetch = 0 : i64, scratch_operands = 0 : i64, tpu.core_type = #tpu.core_type<tc>, window_params = [{pipeline_mode = #tpu.pipeline_mode<synchronous>, transform_indices = @transform_0, window_bounds = array<i64: 8, 16>}, {transform_indices = @transform_1, window_bounds = array<i64: 1, 16, 256>}, {transform_indices = @transform_2, window_bounds = array<i64: 1, 8, 256>}]} {
    %c0 = arith.constant 0 : index
    %c0_0 = arith.constant 0 : index
    %0 = vector.load %arg2[%c0, %c0_0] : memref<8x16xf32, #tpu.memory_space<vmem>>, vector<8x16xf32>
    %c0_1 = arith.constant 0 : index
    %c0_2 = arith.constant 0 : index
    %c0_3 = arith.constant 0 : index
    %1 = vector.load %arg3[%c0_1, %c0_2, %c0_3] : memref<1x16x256xf32, #tpu.memory_space<vmem>>, vector<1x16x256xf32>
    %2 = vector.shape_cast %1 : vector<1x16x256xf32> to vector<16x256xf32>
    %cst = arith.constant dense<0.000000e+00> : vector<8x256xf32>
    %3 = tpu.matmul %0, %2, %cst {dimension_numbers = #tpu.dot_dimension_numbers<[1], [0], [0], [1], [0, 0, 1, 1], [], []>} : vector<8x16xf32>, vector<16x256xf32>, vector<8x256xf32> -> vector<8x256xf32>
    %c0_4 = arith.constant 0 : index
    %c0_5 = arith.constant 0 : index
    %c0_6 = arith.constant 0 : index
    %4 = vector.load %arg4[%c0_4, %c0_5, %c0_6] : memref<1x8x256xf32, #tpu.memory_space<vmem>>, vector<1x8x256xf32>
    %5 = vector.shape_cast %4 : vector<1x8x256xf32> to vector<8x256xf32>
    %6 = vector.shape_cast %3 : vector<8x256xf32> to vector<1x8x256xf32>
    tpu.vector_store %arg4[%c0_4, %c0_5, %c0_6], %6 {strides = array<i32>} : memref<1x8x256xf32, #tpu.memory_space<vmem>>, vector<1x8x256xf32>,
    return
  }
  func.func @transform_0(%arg0: i32, %arg1: i32) -> (i32, i32) {
    %c0_i32 = arith.constant 0 : i32
    %c0_i32_0 = arith.constant 0 : i32
    %c0_i32_1 = arith.constant 0 : i32
    return %c0_i32, %c0_i32_0 : i32, i32
  }
  func.func @transform_1(%arg0: i32, %arg1: i32) -> (i32, i32, i32) {
    %c0_i32 = arith.constant 0 : i32
    %c0_i32_0 = arith.constant 0 : i32
    return %arg0, %c0_i32, %arg1 : i32, i32, i32
  }
  func.func @transform_2(%arg0: i32, %arg1: i32) -> (i32, i32, i32) {
    %c0_i32 = arith.constant 0 : i32
    %c0_i32_0 = arith.constant 0 : i32
    return %arg0, %c0_i32, %arg1 : i32, i32, i32
  }
}

</mosaic_0001>

<llo_original>
// kernel: tpu_custom_call.1
$region0: #{tpu_custom_call.1}
  #allocation0 [shape = 'u32[]', space=smem, size = 0x4, offset = 0x4, fixed_abs, tag = 'smem constant byte address 0x4 - core index']
  #allocation1 [shape = 'u32[72,128]{1,0:T(1,128)}', space=vmem, size = 0x9000, scoped, tag = 'internal scratch']
  %s0 = inlined_call_operand.hbm [shape: f32[8,16], index: 0, kind: input, shape index: {}]
  %s1 = inlined_call_operand.hbm [shape: f32[3,16,256], index: 1, kind: input, shape index: {}]
  %s2 = inlined_call_operand.hbm [shape: f32[3,8,256], index: 2, kind: output, shape index: {}]
  %s3 = sld [smem:[#allocation0]]
  $region49: #{tpu_custom_call.1} parent=0
    _
  %s5 = ssub.s32 1, %s3
  %s6 = scalar_select 0, %s5, %s3
  $region1: #{tpu_custom_call.1} parent=0
    #allocation2 [shape = 'u8[4096]{0}', space=vmem, size = 0x1000, scoped, tag = 'input window, operand 0, single buffered']
    #allocation3 [shape = 's32[2]{0}', space=sflag, size = 0x8, scoped, tag = 'scoped memory for tpu_custom_call.1']
    #allocation4 [shape = 's32[2]{0}', space=sflag, size = 0x8, scoped, tag = 'scoped memory for tpu_custom_call.1']
    #allocation5 [shape = 'u8[32768]{0}', space=vmem, size = 0x8000, scoped, tag = 'input window, operand 1']
    #allocation6 [shape = 's32[2]{0}', space=sflag, size = 0x8, scoped, tag = 'scoped memory for tpu_custom_call.1']
    #allocation7 [shape = 'u8[16384]{0}', space=vmem, size = 0x4000, scoped, tag = 'output window, operand 0']
    %7 = vsyncpa [#allocation3], 0
    %8 = vsyncpa [#allocation6], 0
    %s9 = scalar_lea.sflag [#allocation6], 1
    %10 = vsyncpa %s9, 0
    %11 = vsyncpa [#allocation4], 0
    %s12 = scalar_lea.sflag [#allocation4], 1
    %13 = vsyncpa %s12, 0
    loop: start=0, step=1, limit=5
    $region2: #{tpu_custom_call.1} parent=1 // loop_pre_header
      _
    $region3: #{tpu_custom_call.1} parent=1 // loop_header
      %s15 = sphi 0, %s19
      %p16 = scmp.ge.s32.totalorder %s15, 5
      %s22 = sphi 0, %s34
      %s23 = sphi 0, %s30
      %s24 = sphi 0, %s22
      %s25 = sphi 0, %s23
      %s26 = sphi 0, %s24
      %s27 = sphi 0, %s25
      %s35 = sphi 0, %s35
      %s37 = sphi 0, %s35
      %s38 = sphi 0, %s37
      %s52 = sphi 0, %s38
      %s60 = sphi 0, %s62
      %s63 = sphi 0, %s60
      %s64 = sphi 0, %s63
      %s80 = sphi 0, %s64
      %s88 = sphi 0, %s90
      %s91 = sphi 0, %s88
      %s92 = sphi 0, %s91
      %s108 = sphi 0, %s92
    $region4: #{tpu_custom_call.1} parent=1 // loop_header_branch
      %18 = sbr.rel (%p16) target = $region8
    $region5: #{tpu_custom_call.1} parent=1 // loop_body
      %s20 = ssub.s32 %s15, 1
      %s21 = ssub.s32 %s15, 2
      %s28 = sadd.s32 1, %s23
      %p29 = scmp.ge.s32.totalorder %s28, 1
      %s30 = scalar_select %p29, 0, %s28
      %s31 = sadd.s32 1, %s22
      %s32 = scalar_select %p29, %s31, %s22
      %p33 = scmp.ge.s32.totalorder %s32, 3
      %s34 = scalar_select %p33, 0, %s32
      %s36 = sadd.s32 %s35, 1
      %p39 = scmp.eq.s32.totalorder %s15, 2
      %p40 = scmp.ne.s32.totalorder %s35, %s37
      %p41 = scmp.eq.s32.totalorder %s15, 0
      %p42 = por %p40, %p41
      %p43 = scmp.ne.s32.totalorder %s35, %s37
      %p44 = scmp.eq.s32.totalorder %s20, 2
      %p45 = por %p43, %p44
      %p46 = scmp.ne.s32.totalorder %s37, %s38
      %p47 = scmp.eq.s32.totalorder %s20, 0
      %p48 = por %p46, %p47
      %p49 = scmp.ne.s32.totalorder %s37, %s38
      %p50 = scmp.eq.s32.totalorder %s21, 2
      %p51 = por %p49, %p50
      %p53 = scmp.ne.s32.totalorder %s38, %s52
      %p54 = scmp.eq.s32.totalorder %s21, 0
      %p55 = por %p53, %p54
      %s56 = ssub.s32 %s22, %s34
      %s57 = ssub.s32 %s23, %s30
      %s58 = sor.u32 %s56, %s57
      %p59 = scmp.eq.s32.totalorder %s58, 0
      %s61 = sadd.s32 %s60, 1
      %s62 = scalar_select %p59, %s60, %s61
      %p65 = pneg %p59
      %p66 = scmp.eq.s32.totalorder %s15, 2
      %p67 = por %p65, %p66
      %p68 = scmp.ne.s32.totalorder %s60, %s63
      %p69 = scmp.eq.s32.totalorder %s15, 0
      %p70 = por %p68, %p69
      %p71 = scmp.ne.s32.totalorder %s60, %s63
      %p72 = scmp.eq.s32.totalorder %s20, 2
      %p73 = por %p71, %p72
      %p74 = scmp.ne.s32.totalorder %s63, %s64
      %p75 = scmp.eq.s32.totalorder %s20, 0
      %p76 = por %p74, %p75
      %p77 = scmp.ne.s32.totalorder %s63, %s64
      %p78 = scmp.eq.s32.totalorder %s21, 2
      %p79 = por %p77, %p78
      %p81 = scmp.ne.s32.totalorder %s64, %s80
      %p82 = scmp.eq.s32.totalorder %s21, 0
      %p83 = por %p81, %p82
      %s84 = ssub.s32 %s22, %s34
      %s85 = ssub.s32 %s23, %s30
      %s86 = sor.u32 %s84, %s85
      %p87 = scmp.eq.s32.totalorder %s86, 0
      %s89 = sadd.s32 %s88, 1
      %s90 = scalar_select %p87, %s88, %s89
      %p93 = pneg %p87
      %p94 = scmp.eq.s32.totalorder %s15, 2
      %p95 = por %p93, %p94
      %p96 = scmp.ne.s32.totalorder %s88, %s91
      %p97 = scmp.eq.s32.totalorder %s15, 0
      %p98 = por %p96, %p97
      %p99 = scmp.ne.s32.totalorder %s88, %s91
      %p100 = scmp.eq.s32.totalorder %s20, 2
      %p101 = por %p99, %p100
      %p102 = scmp.ne.s32.totalorder %s91, %s92
      %p103 = scmp.eq.s32.totalorder %s20, 0
      %p104 = por %p102, %p103
      %p105 = scmp.ne.s32.totalorder %s91, %s92
      %p106 = scmp.eq.s32.totalorder %s21, 2
      %p107 = por %p105, %p106
      %p109 = scmp.ne.s32.totalorder %s92, %s108
      %p110 = scmp.eq.s32.totalorder %s21, 0
      %p111 = por %p109, %p110
      %p112 = scmp.le.s32.totalorder 1, %s15
      %p113 = scmp.lt.s32.totalorder %s15, 4
      %p114 = pnand %p112, %p113
      %p115 = pneg %p114
      // Predicated region
      $region9: #{tpu_custom_call.1} parent=5 // pred_check
        _
      $region10: #{tpu_custom_call.1} parent=5 // pred_check_branch
        %117 = sbr.rel (%p114) target = $region12
      $region11: #{tpu_custom_call.1} parent=5 // pred_region
        %s118 = ssub.s32 %s15, 1
        // Predicated region
        $region13: #{tpu_custom_call.1} parent=11 // pred_check
          %p119 = pneg %p48
        $region14: #{tpu_custom_call.1} parent=11 // pred_check_branch
          %121 = sbr.rel (%p119) target = $region16
        $region15: #{tpu_custom_call.1} parent=11 // pred_region
          %123 = vsyncadd [#allocation3], 0
          %s125 = sshll.u32 %s0, 4
          %s126 = int_to_ptr.hbm [resolvable:$true] %s125
          %s127 = sshll.u32 [#allocation2], 4
          %s128 = int_to_ptr.vmem [resolvable:$true] %s127
          %130 = dma.hbm_to_vmem [thread:$0]  %s126, 128, %s128, [#allocation3]
        $region16: #{tpu_custom_call.1} parent=11 // pred_fallthru
          _
      $region12: #{tpu_custom_call.1} parent=5 // pred_fallthru
        _
      %p131 = scmp.lt.s32.totalorder %s15, 3
      // Predicated region
      $region17: #{tpu_custom_call.1} parent=5 // pred_check
        %p132 = pneg %p131
      $region18: #{tpu_custom_call.1} parent=5 // pred_check_branch
        %134 = sbr.rel (%p132) target = $region20
      $region19: #{tpu_custom_call.1} parent=5 // pred_region
        // Predicated region
        $region21: #{tpu_custom_call.1} parent=19 // pred_check
          %p135 = pneg %p70
        $region22: #{tpu_custom_call.1} parent=19 // pred_check_branch
          %137 = sbr.rel (%p135) target = $region24
        $region23: #{tpu_custom_call.1} parent=19 // pred_region
          %s138 = sand.u32 %s60, 1
          %s139 = scalar_lea.sflag [#allocation6], %s138
          %s140 = sand.u32 %s60, 1
          %s141 = smul.addr %s140, 32
          %s142 = scalar_lea.vmem [#allocation5], %s141
          %s143 = smul.u32 2, %s23
          %145 = vsyncadd %s139, 0
          %s146 = smul.addr %s22, 4
          %s147 = sadd.s32 %s143, %s146
          %s148 = smul.addr %s147, 8
          %s149 = scalar_lea.hbm %s1, %s148
          %s150 = sshll.u32 %s149, 4
          %s151 = int_to_ptr.hbm [resolvable:$true] %s150
          %s152 = sshll.u32 %s142, 4
          %s153 = int_to_ptr.vmem [resolvable:$true] %s152
          %158 = dma.hbm_to_vmem [thread:$0]  %s151, 512, %s153, %s139, 256, 256, 16
        $region24: #{tpu_custom_call.1} parent=19 // pred_fallthru
          _
      $region20: #{tpu_custom_call.1} parent=5 // pred_fallthru
        _
      %p159 = scmp.le.s32.totalorder 1, %s15
      %p160 = scmp.lt.s32.totalorder %s15, 4
      %p161 = pnand %p159, %p160
      %p162 = pneg %p161
      // Predicated region
      $region25: #{tpu_custom_call.1} parent=5 // pred_check
        _
      $region26: #{tpu_custom_call.1} parent=5 // pred_check_branch
        %164 = sbr.rel (%p161) target = $region28
      $region27: #{tpu_custom_call.1} parent=5 // pred_region
        %s165 = ssub.s32 %s15, 1
        // Predicated region
        $region29: #{tpu_custom_call.1} parent=27 // pred_check
          %p166 = pneg %p48
        $region30: #{tpu_custom_call.1} parent=27 // pred_check_branch
          %168 = sbr.rel (%p166) target = $region32
        $region31: #{tpu_custom_call.1} parent=27 // pred_region
          %170 = dma.done [#allocation3], 128
        $region32: #{tpu_custom_call.1} parent=27 // pred_fallthru
          _
        %s171 = sand.u32 %s63, 1
        %s172 = scalar_lea.sflag [#allocation6], %s171
        %s173 = sand.u32 %s63, 1
        %s174 = smul.addr %s173, 32
        %s175 = scalar_lea.vmem [#allocation5], %s174
        // Predicated region
        $region33: #{tpu_custom_call.1} parent=27 // pred_check
          %p176 = pneg %p76
        $region34: #{tpu_custom_call.1} parent=27 // pred_check_branch
          %178 = sbr.rel (%p176) target = $region36
        $region35: #{tpu_custom_call.1} parent=27 // pred_region
          %180 = dma.done %s172, 512
        $region36: #{tpu_custom_call.1} parent=27 // pred_fallthru
          _
        %p181 = pneg %p48
        %p182 = pneg %p45
        %s183 = sand.u32 %s63, 1
        %s184 = scalar_lea.sflag [#allocation6], %s183
        %s185 = sand.u32 %s63, 1
        %s186 = smul.addr %s185, 32
        %s187 = scalar_lea.vmem [#allocation5], %s186
        %p188 = pneg %p76
        %p189 = pneg %p73
        %p190 = pneg %p104
        %p191 = pneg %p101
        %s192 = sand.u32 %s91, 1
        %s193 = scalar_lea.sflag [#allocation4], %s192
        %s194 = sand.u32 %s91, 1
        %s195 = smul.addr %s194, 16
        %s196 = scalar_lea.vmem [#allocation7], %s195
        %s197 = smul.u32 2, %s25
        %s198 = smul.u32 2, %s25
        %v199 = vld [vmem:[#allocation2] sm:$0xff]
        %v200 = vld [vmem:[%s175] sm:$0xff]
        %v201 = vld [vmem:[%s175 + $0x8] sm:$0xff]
        %v202 = vld [vmem:[%s175 + $0x10] sm:$0xff]
        %v203 = vld [vmem:[%s175 + $0x18] sm:$0xff]
        %vm204 = vcmask 130048
        %v206 = vsel %vm204, %v199, 0
        %208 = vmatpush.msra.mxu0 0.0
        %209 = vmatpush.msra.mxu0 0.0
        %210 = vmatpush.msra.mxu0 0.0
        %211 = vmatpush.msra.mxu0 0.0
        %212 = vmatpush.msra.mxu0 0.0
        %213 = vmatpush.msra.mxu0 0.0
        %214 = vmatpush.msra.mxu0 0.0
        %215 = vmatpush.msra.mxu0 0.0
        %216 = vmatpush.msra.mxu0 0.0
        %217 = vmatpush.msra.mxu0 0.0
        %218 = vmatpush.msra.mxu0 0.0
        %219 = vmatpush.msra.mxu0 0.0
        %220 = vmatpush.msra.mxu0 0.0
        %221 = vmatpush.msra.mxu0 0.0
        %222 = vmatpush.msra.mxu0 %v202
        %223 = vmatpush.msra.mxu0 %v200
        %224 = vmatmul.f32.gmra.mxu0 %v206
        %v225 = vpop.f32.mrf.mxu0
        %v226 = vadd.f32 0.0, %v225
        %227 = vdwg.mxu0
        %228 = vmatpush.msra.mxu0 0.0
        %229 = vmatpush.msra.mxu0 0.0
        %230 = vmatpush.msra.mxu0 0.0
        %231 = vmatpush.msra.mxu0 0.0
        %232 = vmatpush.msra.mxu0 0.0
        %233 = vmatpush.msra.mxu0 0.0
        %234 = vmatpush.msra.mxu0 0.0
        %235 = vmatpush.msra.mxu0 0.0
        %236 = vmatpush.msra.mxu0 0.0
        %237 = vmatpush.msra.mxu0 0.0
        %238 = vmatpush.msra.mxu0 0.0
        %239 = vmatpush.msra.mxu0 0.0
        %240 = vmatpush.msra.mxu0 0.0
        %241 = vmatpush.msra.mxu0 0.0
        %242 = vmatpush.msra.mxu0 %v203
        %243 = vmatpush.msra.mxu0 %v201
        %244 = vmatmul.f32.gmra.mxu0 %v206
        %v245 = vpop.f32.mrf.mxu0
        %v246 = vadd.f32 0.0, %v245
        %247 = vdwg.mxu0
        %248 = vst [vmem:[%s196] sm:$0xff] %v226
        %249 = vst [vmem:[%s196 + $0x8] sm:$0xff] %v246
        %s250 = sand.u32 %s91, 1
        %s251 = scalar_lea.sflag [#allocation4], %s250
        %s252 = sand.u32 %s91, 1
        %s253 = smul.addr %s252, 16
        %s254 = scalar_lea.vmem [#allocation7], %s253
        // Predicated region
        $region37: #{tpu_custom_call.1} parent=27 // pred_check
          %p255 = pneg %p101
        $region38: #{tpu_custom_call.1} parent=27 // pred_check_branch
          %257 = sbr.rel (%p255) target = $region40
        $region39: #{tpu_custom_call.1} parent=27 // pred_region
          %s258 = smul.u32 2, %s25
          %260 = vsyncadd %s251, 0
          %s261 = smul.addr %s24, 2
          %s262 = sadd.s32 %s258, %s261
          %s263 = smul.addr %s262, 8
          %s264 = scalar_lea.hbm %s2, %s263
          %s266 = sshll.u32 %s254, 4
          %s267 = int_to_ptr.vmem [resolvable:$true] %s266
          %s268 = sshll.u32 %s264, 4
          %s269 = int_to_ptr.hbm [resolvable:$true] %s268
          %271 = dma.vmem_to_hbm [thread:$0]  %s267, 256, %s269, %s251
        $region40: #{tpu_custom_call.1} parent=27 // pred_fallthru
          _
      $region28: #{tpu_custom_call.1} parent=5 // pred_fallthru
        _
      %p272 = scmp.le.s32.totalorder 2, %s15
      // Predicated region
      $region41: #{tpu_custom_call.1} parent=5 // pred_check
        %p273 = pneg %p272
      $region42: #{tpu_custom_call.1} parent=5 // pred_check_branch
        %275 = sbr.rel (%p273) target = $region44
      $region43: #{tpu_custom_call.1} parent=5 // pred_region
        %s276 = ssub.s32 %s15, 2
        // Predicated region
        $region45: #{tpu_custom_call.1} parent=43 // pred_check
          %p277 = pneg %p107
        $region46: #{tpu_custom_call.1} parent=43 // pred_check_branch
          %279 = sbr.rel (%p277) target = $region48
        $region47: #{tpu_custom_call.1} parent=43 // pred_region
          %s280 = sand.u32 %s92, 1
          %s281 = scalar_lea.sflag [#allocation4], %s280
          %s282 = sand.u32 %s92, 1
          %s283 = smul.addr %s282, 16
          %s284 = scalar_lea.vmem [#allocation7], %s283
          %286 = dma.done %s281, 256
        $region48: #{tpu_custom_call.1} parent=43 // pred_fallthru
          _
      $region44: #{tpu_custom_call.1} parent=5 // pred_fallthru
        _
    $region6: #{tpu_custom_call.1} parent=1 // loop_footer
      %s19 = sadd.s32 1, %s15
    $region7: #{tpu_custom_call.1} parent=1 // loop_footer_branch
      %14 = sbr.rel target = $region3
    $region8: #{tpu_custom_call.1} parent=1 // loop_exit
      _
    %287 = vsyncpa [#allocation3], 1
    %s288 = scalar_lea.sflag [#allocation3], 1
    %289 = vsyncpa %s288, 1
    %290 = vsyncpa [#allocation6], 1
    %s291 = scalar_lea.sflag [#allocation6], 1
    %292 = vsyncpa %s291, 1
    %293 = vsyncpa [#allocation4], 1
    %s294 = scalar_lea.sflag [#allocation4], 1
    %295 = vsyncpa %s294, 1

</llo_original>
